<compile_context>
chip_gen: v7x
topology: tpu7x:2x2x1
jax: 0.10.0
libtpu: 0.0.40
codegen_flags: <defaults>
</compile_context>

<pallas_src>
import functools
import math

import jax
import jax.numpy as jnp
from jax.experimental import pallas as pl
from jax.experimental.pallas import tpu as pltpu


def _conv1d_kernel(x_ref, w_ref, b_ref, o_ref, *, K, dilation, tl, tiled):
    # x_ref: (C_in, Lp)    w_ref: (K, C_out, C_in)
    # b_ref: (C_out, 1)    o_ref: (C_out, tl)
    if tiled:
        # Tile starts are multiples of tl (tl itself a multiple of 128 here).
        start = pl.multiple_of(pl.program_id(1) * tl, tl)
    else:
        start = 0

    acc = jnp.zeros(o_ref.shape, jnp.float32)
    for k in range(K):  # K is a small static int -> unrolled
        xw = x_ref[:, pl.ds(start + k * dilation, tl)]          # (C_in, tl)
        acc = acc + jnp.dot(w_ref[k], xw,                         # (C_out, tl)
                            preferred_element_type=jnp.float32)
    acc = acc + b_ref[...].astype(jnp.float32)                   # broadcast lanes
    o_ref[...] = acc.astype(o_ref.dtype)


def conv1d_pallas(x, weight, bias=None, *, stride=1, padding=None, dilation=1):
    """Conv1d forward (ConvNorm.forward) as a Pallas TPU kernel."""
    B, C_in, L = x.shape
    C_out, C_in_w, K = weight.shape
    assert C_in_w == C_in
    if padding is None:
        assert K % 2 == 1
        padding = int(dilation * (K - 1) / 2)

    # Output length at stride 1 (strided outputs are a subsample of these).
    L_out_s1 = L + 2 * padding - dilation * (K - 1)
    assert L_out_s1 >= 1

    # Tile the output length.  Single full-length tile for small L; otherwise
    # 512-wide tiles (multiple of 128 lanes -> dense vst stores).
    if L_out_s1 <= 512:
        tl, n_tiles = L_out_s1, 1
    else:
        tl = 512
        n_tiles = pl.cdiv(L_out_s1, tl)
    L_out_pad = tl * n_tiles

    # Padded input length the kernel indexes into (conv padding up front, zeros
    # at the back so every tile's receptive field is in bounds).
    Lp = L_out_pad + dilation * (K - 1)
    pad_left = padding
    pad_right = Lp - L - pad_left
    assert pad_right >= 0
    xp = jnp.pad(x, ((0, 0), (0, 0), (pad_left, pad_right)))

    # (K, C_out, C_in): each tap is a clean (sublane=C_out, lane=C_in) 2-D tile.
    w_t = jnp.transpose(weight, (2, 0, 1))
    if bias is None:
        b2 = jnp.zeros((C_out, 1), jnp.float32)
    else:
        b2 = bias.reshape(C_out, 1).astype(jnp.float32)

    kernel = functools.partial(
        _conv1d_kernel, K=K, dilation=dilation, tl=tl, tiled=(n_tiles > 1))

    out_s1 = pl.pallas_call(
        kernel,
        out_shape=jax.ShapeDtypeStruct((B, C_out, L_out_pad), x.dtype),
        grid_spec=pltpu.PrefetchScalarGridSpec(
            num_scalar_prefetch=0,
            grid=(B, n_tiles),
            in_specs=[
                # Full padded length per batch (loaded once per batch element).
                pl.BlockSpec((None, C_in, Lp), lambda b, j: (b, 0, 0)),
                # Whole (tiny) weight and bias, fetched once.
                pl.BlockSpec((K, C_out, C_in), lambda b, j: (0, 0, 0)),
                pl.BlockSpec((C_out, 1), lambda b, j: (0, 0)),
            ],
            out_specs=pl.BlockSpec((None, C_out, tl), lambda b, j: (b, 0, j)),
        ),
        compiler_params=pltpu.CompilerParams(
            dimension_semantics=("parallel", "parallel")),
    )(xp, w_t, b2)

    # Strided conv == subsample of the stride-1 conv; trim tile padding.
    L_out = (L + 2 * padding - dilation * (K - 1) - 1) // stride + 1
    out = out_s1[:, :, : (L_out - 1) * stride + 1 : stride]
    return out


class ConvNorm:
    """JAX/Pallas port of ConvNorm (thin Conv1d wrapper)."""

    def __init__(self, key, in_channels, out_channels, kernel_size=1, stride=1,
                 padding=None, dilation=1, bias=True, spectral_norm=False):
        if padding is None:
            assert kernel_size % 2 == 1
            padding = int(dilation * (kernel_size - 1) / 2)
        self.stride = stride
        self.padding = padding
        self.dilation = dilation
        # torch.nn.Conv1d default init: U(-bound, bound), bound = 1/sqrt(C_in*K)
        kw, kb = jax.random.split(key)
        bound = 1.0 / math.sqrt(in_channels * kernel_size)
        self.weight = jax.random.uniform(
            kw, (out_channels, in_channels, kernel_size),
            minval=-bound, maxval=bound, dtype=jnp.float32)
        self.bias = (jax.random.uniform(
            kb, (out_channels,), minval=-bound, maxval=bound,
            dtype=jnp.float32) if bias else None)
        # TODO(synk): spectral_norm not implemented (training-time weight
        # reparameterization; no clean single-kernel Pallas equivalent).
        assert not spectral_norm

    def __call__(self, x):
        return conv1d_pallas(x, self.weight, self.bias, stride=self.stride,
                             padding=self.padding, dilation=self.dilation)


def _reference(x, weight, bias, stride, padding, dilation):
    out = jax.lax.conv_general_dilated(
        x, weight,
        window_strides=(stride,),
        padding=[(padding, padding)],
        rhs_dilation=(dilation,),
        dimension_numbers=("NCH", "OIH", "NCH"))
    if bias is not None:
        out = out + bias[None, :, None]
    return out


if __name__ == "__main__":
    key = jax.random.PRNGKey(0)
    kx, k1, k2, k3 = jax.random.split(key, 4)

    B, C_in, L = 2, 4, 16
    x = jax.random.normal(kx, (B, C_in, L), dtype=jnp.float32)

    # Config 1: ConvNorm defaults (kernel_size=1, 'same' padding, bias).
    m1 = ConvNorm(k1, C_in, 8)
    y1 = m1(x)
    jax.block_until_ready(y1)
    r1 = _reference(x, m1.weight, m1.bias, 1, m1.padding, 1)
    assert y1.shape == r1.shape
    assert jnp.allclose(y1, r1, atol=1e-5, rtol=1e-5)

    # Config 2: kernel_size=3, dilation=2, 'same' padding.
    m2 = ConvNorm(k2, C_in, 8, kernel_size=3, dilation=2)
    y2 = m2(x)
    jax.block_until_ready(y2)
    r2 = _reference(x, m2.weight, m2.bias, 1, m2.padding, 2)
    assert y2.shape == r2.shape
    assert jnp.allclose(y2, r2, atol=1e-5, rtol=1e-5)

    # Config 3: kernel_size=5, stride=2, no bias.
    m3 = ConvNorm(k3, C_in, 8, kernel_size=5, stride=2, bias=False)
    y3 = m3(x)
    jax.block_until_ready(y3)
    r3 = _reference(x, m3.weight, None, 2, m3.padding, 1)
    assert y3.shape == r3.shape
    assert jnp.allclose(y3, r3, atol=1e-5, rtol=1e-5)

    print("KERNEL_OK")
</pallas_src>

<mosaic_0001>
module attributes {stable_mosaic.version = 11 : i64} {
  func.func @_conv1d_kernel(%arg0: i32, %arg1: i32, %arg2: memref<1x4x16xf32, #tpu.memory_space<vmem>>, %arg3: memref<1x8x4xf32, #tpu.memory_space<vmem>>, %arg4: memref<8x1xf32, #tpu.memory_space<vmem>>, %arg5: memref<1x8x16xf32, #tpu.memory_space<vmem>>) attributes {dimension_semantics = [#tpu.dimension_semantics<parallel>, #tpu.dimension_semantics<parallel>], iteration_bounds = array<i64: 2, 1>, scalar_prefetch = 0 : i64, scratch_operands = 0 : i64, tpu.core_type = #tpu.core_type<tc>, window_params = [{transform_indices = @transform_0, window_bounds = array<i64: 1, 4, 16>}, {pipeline_mode = #tpu.pipeline_mode<synchronous>, transform_indices = @transform_1, window_bounds = array<i64: 1, 8, 4>}, {pipeline_mode = #tpu.pipeline_mode<synchronous>, transform_indices = @transform_2, window_bounds = array<i64: 8, 1>}, {transform_indices = @transform_3, window_bounds = array<i64: 1, 8, 16>}]} {
    %cst = arith.constant 0.000000e+00 : f32
    %0 = vector.broadcast %cst : f32 to vector<8x16xf32>
    %c0 = arith.constant 0 : index
    %c0_0 = arith.constant 0 : index
    %c0_1 = arith.constant 0 : index
    %1 = vector.load %arg2[%c0, %c0_0, %c0_1] : memref<1x4x16xf32, #tpu.memory_space<vmem>>, vector<1x4x16xf32>
    %2 = vector.shape_cast %1 : vector<1x4x16xf32> to vector<4x16xf32>
    %c0_2 = arith.constant 0 : index
    %c0_3 = arith.constant 0 : index
    %c0_4 = arith.constant 0 : index
    %3 = vector.load %arg3[%c0_2, %c0_3, %c0_4] : memref<1x8x4xf32, #tpu.memory_space<vmem>>, vector<1x8x4xf32>
    %4 = vector.shape_cast %3 : vector<1x8x4xf32> to vector<8x4xf32>
    %cst_5 = arith.constant dense<0.000000e+00> : vector<8x16xf32>
    %5 = tpu.matmul %4, %2, %cst_5 {dimension_numbers = #tpu.dot_dimension_numbers<[1], [0], [0], [1], [0, 0, 1, 1], [], []>} : vector<8x4xf32>, vector<4x16xf32>, vector<8x16xf32> -> vector<8x16xf32>
    %6 = arith.addf %0, %5 : vector<8x16xf32>
    %c0_6 = arith.constant 0 : index
    %c0_7 = arith.constant 0 : index
    %7 = vector.load %arg4[%c0_6, %c0_7] : memref<8x1xf32, #tpu.memory_space<vmem>>, vector<8x1xf32>
    %8 = vector.broadcast %7 : vector<8x1xf32> to vector<8x16xf32>
    %9 = arith.addf %6, %8 : vector<8x16xf32>
    %c0_8 = arith.constant 0 : index
    %c0_9 = arith.constant 0 : index
    %c0_10 = arith.constant 0 : index
    %10 = vector.load %arg5[%c0_8, %c0_9, %c0_10] : memref<1x8x16xf32, #tpu.memory_space<vmem>>, vector<1x8x16xf32>
    %11 = vector.shape_cast %10 : vector<1x8x16xf32> to vector<8x16xf32>
    %12 = vector.shape_cast %9 : vector<8x16xf32> to vector<1x8x16xf32>
    tpu.vector_store %arg5[%c0_8, %c0_9, %c0_10], %12 {strides = array<i32>} : memref<1x8x16xf32, #tpu.memory_space<vmem>>, vector<1x8x16xf32>,
    return
  }
  func.func @transform_0(%arg0: i32, %arg1: i32) -> (i32, i32, i32) {
    %c0_i32 = arith.constant 0 : i32
    %c0_i32_0 = arith.constant 0 : i32
    %c0_i32_1 = arith.constant 0 : i32
    return %arg0, %c0_i32, %c0_i32_0 : i32, i32, i32
  }
  func.func @transform_1(%arg0: i32, %arg1: i32) -> (i32, i32, i32) {
    %c0_i32 = arith.constant 0 : i32
    %c0_i32_0 = arith.constant 0 : i32
    %c0_i32_1 = arith.constant 0 : i32
    %c0_i32_2 = arith.constant 0 : i32
    return %c0_i32, %c0_i32_0, %c0_i32_1 : i32, i32, i32
  }
  func.func @transform_2(%arg0: i32, %arg1: i32) -> (i32, i32) {
    %c0_i32 = arith.constant 0 : i32
    %c0_i32_0 = arith.constant 0 : i32
    %c0_i32_1 = arith.constant 0 : i32
    return %c0_i32, %c0_i32_0 : i32, i32
  }
  func.func @transform_3(%arg0: i32, %arg1: i32) -> (i32, i32, i32) {
    %c0_i32 = arith.constant 0 : i32
    %c0_i32_0 = arith.constant 0 : i32
    return %arg0, %c0_i32, %arg1 : i32, i32, i32
  }
}

</mosaic_0001>

<llo_original>
// kernel: tpu_custom_call.1
$region0: #{tpu_custom_call.1}
  #allocation0 [shape = 'u32[]', space=smem, size = 0x4, offset = 0x4, fixed_abs, tag = 'smem constant byte address 0x4 - core index']
  #allocation1 [shape = 'u32[144,128]{1,0:T(1,128)}', space=vmem, size = 0x12000, scoped, tag = 'internal scratch']
  %s0 = inlined_call_operand.vmem [shape: f32[2,4,16], index: 0, kind: input, shape index: {}]
  %s1 = inlined_call_operand.vmem [shape: f32[1,8,4], index: 1, kind: input, shape index: {}]
  %s2 = inlined_call_operand.vmem [shape: f32[8,1], index: 2, kind: input, shape index: {}]
  %s3 = inlined_call_operand.hbm [shape: f32[2,8,16], index: 3, kind: output, shape index: {}]
  %s4 = sld [smem:[#allocation0]]
  $region45: #{tpu_custom_call.1} parent=0
    _
  %s6 = ssub.s32 1, %s4
  %s7 = scalar_select 0, %s6, %s4
  $region1: #{tpu_custom_call.1} parent=0
    #allocation2 [shape = 'u8[8192]{0}', space=vmem, size = 0x2000, scoped, tag = 'output window, operand 0']
    #allocation3 [shape = 's32[2]{0}', space=sflag, size = 0x8, scoped, tag = 'scoped memory for tpu_custom_call.1']
    %8 = vsyncpa [#allocation3], 0
    %s9 = scalar_lea.sflag [#allocation3], 1
    %10 = vsyncpa %s9, 0
    loop: start=0, step=1, limit=4
    $region2: #{tpu_custom_call.1} parent=1 // loop_pre_header
      _
    $region3: #{tpu_custom_call.1} parent=1 // loop_header
      %s12 = sphi 0, %s16
      %p13 = scmp.ge.s32.totalorder %s12, 4
      %s19 = sphi 0, %s31
      %s20 = sphi 0, %s27
      %s21 = sphi 0, %s19
      %s22 = sphi 0, %s20
      %s23 = sphi 0, %s21
      %s24 = sphi 0, %s22
      %s34 = sphi 0, %s36
      %s37 = sphi 0, %s34
      %s38 = sphi 0, %s37
      %s54 = sphi 0, %s38
      %s58 = sphi 0, %s58
      %s60 = sphi 0, %s58
      %s61 = sphi 0, %s60
      %s75 = sphi 0, %s61
      %s79 = sphi 0, %s79
      %s81 = sphi 0, %s79
      %s82 = sphi 0, %s81
      %s96 = sphi 0, %s82
      %s104 = sphi 0, %s106
      %s107 = sphi 0, %s104
      %s108 = sphi 0, %s107
      %s124 = sphi 0, %s108
    $region4: #{tpu_custom_call.1} parent=1 // loop_header_branch
      %15 = sbr.rel (%p13) target = $region8
    $region5: #{tpu_custom_call.1} parent=1 // loop_body
      %s17 = ssub.s32 %s12, 1
      %s18 = ssub.s32 %s12, 2
      %s25 = sadd.s32 1, %s20
      %p26 = scmp.ge.s32.totalorder %s25, 1
      %s27 = scalar_select %p26, 0, %s25
      %s28 = sadd.s32 1, %s19
      %s29 = scalar_select %p26, %s28, %s19
      %p30 = scmp.ge.s32.totalorder %s29, 2
      %s31 = scalar_select %p30, 0, %s29
      %s32 = ssub.s32 %s19, %s31
      %p33 = scmp.eq.s32.totalorder %s32, 0
      %s35 = sadd.s32 %s34, 1
      %s36 = scalar_select %p33, %s34, %s35
      %p39 = pneg %p33
      %p40 = scmp.eq.s32.totalorder %s12, 1
      %p41 = por %p39, %p40
      %p42 = scmp.ne.s32.totalorder %s34, %s37
      %p43 = scmp.eq.s32.totalorder %s12, 0
      %p44 = por %p42, %p43
      %p45 = scmp.ne.s32.totalorder %s34, %s37
      %p46 = scmp.eq.s32.totalorder %s17, 1
      %p47 = por %p45, %p46
      %p48 = scmp.ne.s32.totalorder %s37, %s38
      %p49 = scmp.eq.s32.totalorder %s17, 0
      %p50 = por %p48, %p49
      %p51 = scmp.ne.s32.totalorder %s37, %s38
      %p52 = scmp.eq.s32.totalorder %s18, 1
      %p53 = por %p51, %p52
      %p55 = scmp.ne.s32.totalorder %s38, %s54
      %p56 = scmp.eq.s32.totalorder %s18, 0
      %p57 = por %p55, %p56
      %s59 = sadd.s32 %s58, 1
      %p62 = scmp.eq.s32.totalorder %s12, 1
      %p63 = scmp.ne.s32.totalorder %s58, %s60
      %p64 = scmp.eq.s32.totalorder %s12, 0
      %p65 = por %p63, %p64
      %p66 = scmp.ne.s32.totalorder %s58, %s60
      %p67 = scmp.eq.s32.totalorder %s17, 1
      %p68 = por %p66, %p67
      %p69 = scmp.ne.s32.totalorder %s60, %s61
      %p70 = scmp.eq.s32.totalorder %s17, 0
      %p71 = por %p69, %p70
      %p72 = scmp.ne.s32.totalorder %s60, %s61
      %p73 = scmp.eq.s32.totalorder %s18, 1
      %p74 = por %p72, %p73
      %p76 = scmp.ne.s32.totalorder %s61, %s75
      %p77 = scmp.eq.s32.totalorder %s18, 0
      %p78 = por %p76, %p77
      %s80 = sadd.s32 %s79, 1
      %p83 = scmp.eq.s32.totalorder %s12, 1
      %p84 = scmp.ne.s32.totalorder %s79, %s81
      %p85 = scmp.eq.s32.totalorder %s12, 0
      %p86 = por %p84, %p85
      %p87 = scmp.ne.s32.totalorder %s79, %s81
      %p88 = scmp.eq.s32.totalorder %s17, 1
      %p89 = por %p87, %p88
      %p90 = scmp.ne.s32.totalorder %s81, %s82
      %p91 = scmp.eq.s32.totalorder %s17, 0
      %p92 = por %p90, %p91
      %p93 = scmp.ne.s32.totalorder %s81, %s82
      %p94 = scmp.eq.s32.totalorder %s18, 1
      %p95 = por %p93, %p94
      %p97 = scmp.ne.s32.totalorder %s82, %s96
      %p98 = scmp.eq.s32.totalorder %s18, 0
      %p99 = por %p97, %p98
      %s100 = ssub.s32 %s19, %s31
      %s101 = ssub.s32 %s20, %s27
      %s102 = sor.u32 %s100, %s101
      %p103 = scmp.eq.s32.totalorder %s102, 0
      %s105 = sadd.s32 %s104, 1
      %s106 = scalar_select %p103, %s104, %s105
      %p109 = pneg %p103
      %p110 = scmp.eq.s32.totalorder %s12, 1
      %p111 = por %p109, %p110
      %p112 = scmp.ne.s32.totalorder %s104, %s107
      %p113 = scmp.eq.s32.totalorder %s12, 0
      %p114 = por %p112, %p113
      %p115 = scmp.ne.s32.totalorder %s104, %s107
      %p116 = scmp.eq.s32.totalorder %s17, 1
      %p117 = por %p115, %p116
      %p118 = scmp.ne.s32.totalorder %s107, %s108
      %p119 = scmp.eq.s32.totalorder %s17, 0
      %p120 = por %p118, %p119
      %p121 = scmp.ne.s32.totalorder %s107, %s108
      %p122 = scmp.eq.s32.totalorder %s18, 1
      %p123 = por %p121, %p122
      %p125 = scmp.ne.s32.totalorder %s108, %s124
      %p126 = scmp.eq.s32.totalorder %s18, 0
      %p127 = por %p125, %p126
      %p128 = scmp.le.s32.totalorder 1, %s12
      %p129 = scmp.lt.s32.totalorder %s12, 3
      %p130 = pnand %p128, %p129
      %p131 = pneg %p130
      // Predicated region
      $region9: #{tpu_custom_call.1} parent=5 // pred_check
        _
      $region10: #{tpu_custom_call.1} parent=5 // pred_check_branch
        %133 = sbr.rel (%p130) target = $region12
      $region11: #{tpu_custom_call.1} parent=5 // pred_region
        %s134 = ssub.s32 %s12, 1
        // Predicated region
        $region13: #{tpu_custom_call.1} parent=11 // pred_check
          %p135 = pneg %p71
        $region14: #{tpu_custom_call.1} parent=11 // pred_check_branch
          %137 = sbr.rel (%p135) target = $region16
        $region15: #{tpu_custom_call.1} parent=11 // pred_region
          _
        $region16: #{tpu_custom_call.1} parent=11 // pred_fallthru
          _
        // Predicated region
        $region17: #{tpu_custom_call.1} parent=11 // pred_check
          %p138 = pneg %p92
        $region18: #{tpu_custom_call.1} parent=11 // pred_check_branch
          %140 = sbr.rel (%p138) target = $region20
        $region19: #{tpu_custom_call.1} parent=11 // pred_region
          _
        $region20: #{tpu_custom_call.1} parent=11 // pred_fallthru
          _
      $region12: #{tpu_custom_call.1} parent=5 // pred_fallthru
        _
      %p141 = scmp.lt.s32.totalorder %s12, 2
      // Predicated region
      $region21: #{tpu_custom_call.1} parent=5 // pred_check
        %p142 = pneg %p141
      $region22: #{tpu_custom_call.1} parent=5 // pred_check_branch
        %144 = sbr.rel (%p142) target = $region24
      $region23: #{tpu_custom_call.1} parent=5 // pred_region
        // Predicated region
        $region25: #{tpu_custom_call.1} parent=23 // pred_check
          %p145 = pneg %p44
        $region26: #{tpu_custom_call.1} parent=23 // pred_check_branch
          %147 = sbr.rel (%p145) target = $region28
        $region27: #{tpu_custom_call.1} parent=23 // pred_region
          %p148 = scmp.lt.s32.totalorder %s19, 1
          %s149 = scalar_select %p148, %s19, 1
          %s150 = smul.addr %s149, 4
          %s151 = scalar_lea.vmem %s0, %s150
        $region28: #{tpu_custom_call.1} parent=23 // pred_fallthru
          _
      $region24: #{tpu_custom_call.1} parent=5 // pred_fallthru
        _
      %p152 = scmp.le.s32.totalorder 1, %s12
      %p153 = scmp.lt.s32.totalorder %s12, 3
      %p154 = pnand %p152, %p153
      %p155 = pneg %p154
      // Predicated region
      $region29: #{tpu_custom_call.1} parent=5 // pred_check
        _
      $region30: #{tpu_custom_call.1} parent=5 // pred_check_branch
        %157 = sbr.rel (%p154) target = $region32
      $region31: #{tpu_custom_call.1} parent=5 // pred_region
        %s158 = ssub.s32 %s12, 1
        %p159 = scmp.lt.s32.totalorder %s21, 1
        %s160 = scalar_select %p159, %s21, 1
        %s161 = smul.addr %s160, 4
        %s162 = scalar_lea.vmem %s0, %s161
        %p163 = pneg %p50
        %p164 = pneg %p47
        %p165 = pneg %p71
        %p166 = pneg %p68
        %p167 = pneg %p92
        %p168 = pneg %p89
        %p169 = pneg %p120
        %p170 = pneg %p117
        %s171 = sand.u32 %s107, 1
        %s172 = scalar_lea.sflag [#allocation3], %s171
        %s173 = sand.u32 %s107, 1
        %s174 = smul.addr %s173, 8
        %s175 = scalar_lea.vmem [#allocation2], %s174
        %p176 = scmp.lt.s32.totalorder %s21, 1
        %s177 = scalar_select %p176, %s21, 1
        %s178 = smul.addr %s177, 4
        %s179 = scalar_lea.vmem %s0, %s178
        %v180 = vld [vmem:[%s179] sm:$0xf]
        %v181 = vld [vmem:[%s1] sm:$0xff]
        %v182 = vld [vmem:[%s2] sm:$0xff]
        %184 = vset.pattern.permute.xlu0 0
        %185 = vperm.xlu0 %184, %v182
        %v186 = vpop.permute.xlu0 %185
        %vm188 = vcmask 31744
        %v190 = vsel %vm188, %v181, 0
        %vm192 = vcmask 1043456
        %v194 = vsel %vm192, %v180, 0
        %196 = vmatprep.subr.mxu0 0.0
        %197 = vmatpush1.msra.mxu0 %v194
        %198 = vmatprep.subr.mxu0 0.0
        %199 = vmatpush1.msra.mxu0 0.0
        %200 = vmatprep.subr.mxu0 0.0
        %201 = vmatpush1.msra.mxu0 0.0
        %202 = vmatprep.subr.mxu0 0.0
        %203 = vmatpush1.msra.mxu0 0.0
        %204 = vmatprep.subr.mxu0 0.0
        %205 = vmatpush1.msra.mxu0 0.0
        %206 = vmatprep.subr.mxu0 0.0
        %207 = vmatpush1.msra.mxu0 0.0
        %208 = vmatprep.subr.mxu0 0.0
        %209 = vmatpush1.msra.mxu0 0.0
        %210 = vmatprep.subr.mxu0 0.0
        %211 = vmatpush1.msra.mxu0 0.0
        %212 = vmatprep.subr.mxu0 0.0
        %213 = vmatpush1.msra.mxu0 0.0
        %214 = vmatprep.subr.mxu0 0.0
        %215 = vmatpush1.msra.mxu0 0.0
        %216 = vmatprep.subr.mxu0 0.0
        %217 = vmatpush1.msra.mxu0 0.0
        %218 = vmatprep.subr.mxu0 0.0
        %219 = vmatpush1.msra.mxu0 0.0
        %220 = vmatprep.subr.mxu0 0.0
        %221 = vmatpush1.msra.mxu0 0.0
        %222 = vmatprep.subr.mxu0 0.0
        %223 = vmatpush1.msra.mxu0 0.0
        %224 = vmatprep.subr.mxu0 0.0
        %225 = vmatpush1.msra.mxu0 0.0
        %226 = vmatprep.subr.mxu0 0.0
        %227 = vmatpush1.msra.mxu0 0.0
        %228 = vmatprep.subr.mxu0 0.0
        %229 = vmatpush1.msra.mxu0 0.0
        %230 = vmatprep.subr.mxu0 0.0
        %231 = vmatpush1.msra.mxu0 0.0
        %232 = vmatprep.subr.mxu0 0.0
        %233 = vmatpush1.msra.mxu0 0.0
        %234 = vmatprep.subr.mxu0 0.0
        %235 = vmatpush1.msra.mxu0 0.0
        %236 = vmatprep.subr.mxu0 0.0
        %237 = vmatpush1.msra.mxu0 0.0
        %238 = vmatprep.subr.mxu0 0.0
        %239 = vmatpush1.msra.mxu0 0.0
        %240 = vmatprep.subr.mxu0 0.0
        %241 = vmatpush1.msra.mxu0 0.0
        %242 = vmatprep.subr.mxu0 0.0
        %243 = vmatpush1.msra.mxu0 0.0
        %244 = vmatprep.subr.mxu0 0.0
        %245 = vmatpush1.msra.mxu0 0.0
        %246 = vmatprep.subr.mxu0 0.0
        %247 = vmatpush1.msra.mxu0 0.0
        %248 = vmatprep.subr.mxu0 0.0
        %249 = vmatpush1.msra.mxu0 0.0
        %250 = vmatprep.subr.mxu0 0.0
        %251 = vmatpush1.msra.mxu0 0.0
        %252 = vmatprep.subr.mxu0 0.0
        %253 = vmatpush1.msra.mxu0 0.0
        %254 = vmatprep.subr.mxu0 0.0
        %255 = vmatpush1.msra.mxu0 0.0
        %256 = vmatprep.subr.mxu0 0.0
        %257 = vmatpush1.msra.mxu0 0.0
        %258 = vmatprep.subr.mxu0 0.0
        %259 = vmatpush1.msra.mxu0 0.0
        %260 = vmatprep.mubr.f32.mxu0 0.0
        %261 = vmatmul.mubr.f32.gmra.mrb[0].mxu0 %v190
        %v262 = vpop.f32.mrb[0].mxu0
        %v263 = vadd.f32 %v186, %v262
        %v264 = vpop.f32.mrb[0].mxu0
        %265 = vdwg.mxu0
        %vm266 = vcmask 130048
        %267 = vst.msk [vmem:[%s175] sm:$0xff] %vm266, %v263
        %s268 = sand.u32 %s107, 1
        %s269 = scalar_lea.sflag [#allocation3], %s268
        %s270 = sand.u32 %s107, 1
        %s271 = smul.addr %s270, 8
        %s272 = scalar_lea.vmem [#allocation2], %s271
        // Predicated region
        $region33: #{tpu_custom_call.1} parent=31 // pred_check
          %p273 = pneg %p117
        $region34: #{tpu_custom_call.1} parent=31 // pred_check_branch
          %275 = sbr.rel (%p273) target = $region36
        $region35: #{tpu_custom_call.1} parent=31 // pred_region
          %s277 = ssub.s32 128, 128
          %278 = vsyncadd %s269, %s277
          %s279 = sadd.s32 %s22, %s21
          %s280 = smul.addr %s279, 128
          %s281 = scalar_lea.hbm %s3, %s280
          %s283 = sshll.u32 %s272, 4
          %s284 = int_to_ptr.vmem [resolvable:$true] %s283
          %286 = dma.vmem_to_hbm [thread:$0]  %s284, 128, %s281, %s269
        $region36: #{tpu_custom_call.1} parent=31 // pred_fallthru
          _
      $region32: #{tpu_custom_call.1} parent=5 // pred_fallthru
        _
      %p287 = scmp.le.s32.totalorder 2, %s12
      // Predicated region
      $region37: #{tpu_custom_call.1} parent=5 // pred_check
        %p288 = pneg %p287
      $region38: #{tpu_custom_call.1} parent=5 // pred_check_branch
        %290 = sbr.rel (%p288) target = $region40
      $region39: #{tpu_custom_call.1} parent=5 // pred_region
        %s291 = ssub.s32 %s12, 2
        // Predicated region
        $region41: #{tpu_custom_call.1} parent=39 // pred_check
          %p292 = pneg %p123
        $region42: #{tpu_custom_call.1} parent=39 // pred_check_branch
          %294 = sbr.rel (%p292) target = $region44
        $region43: #{tpu_custom_call.1} parent=39 // pred_region
          %s295 = sand.u32 %s108, 1
          %s296 = scalar_lea.sflag [#allocation3], %s295
          %s297 = sand.u32 %s108, 1
          %s298 = smul.addr %s297, 8
          %s299 = scalar_lea.vmem [#allocation2], %s298
          %300 = dma.done %s296, 128
        $region44: #{tpu_custom_call.1} parent=39 // pred_fallthru
          _
      $region40: #{tpu_custom_call.1} parent=5 // pred_fallthru
        _
    $region6: #{tpu_custom_call.1} parent=1 // loop_footer
      %s16 = sadd.s32 1, %s12
    $region7: #{tpu_custom_call.1} parent=1 // loop_footer_branch
      %11 = sbr.rel target = $region3
    $region8: #{tpu_custom_call.1} parent=1 // loop_exit
      _
    %301 = vsyncpa [#allocation3], 1
    %s302 = scalar_lea.sflag [#allocation3], 1
    %303 = vsyncpa %s302, 1

</llo_original>
